<compile_context>
chip_gen: v7x
topology: tpu7x:2x2x1
jax: 0.10.0
libtpu: 0.0.40
codegen_flags: <defaults>
</compile_context>

<pallas_src>
import jax
import jax.numpy as jnp
from jax import lax
from jax.experimental import pallas as pl
from jax.experimental.pallas import tpu as pltpu


def _round_up(x, m):
    return ((x + m - 1) // m) * m


def _choose_tile_b(batch, d, h, vmem_budget_bytes=8 * 1024 * 1024):
    # Rough per-row VMEM cost: double-buffered bf16 x rows + f32 hidden row
    # + f32 output element.  Clamp to [128, 4096] and a multiple of 128 so the
    # lane-dense (1, TILE_B) output tiles cleanly.
    per_row = 2 * d * 2 + h * 4 + 4
    tile = vmem_budget_bytes // max(per_row, 1)
    tile = max(128, min(4096, (tile // 128) * 128))
    tile = min(tile, _round_up(max(batch, 1), 128))
    return int(tile)


def mlp_kernel(x_ref, w1_ref, b1_ref, w2_ref, b2_ref, o_ref):
    # Hidden layer on the MXU: bf16 inputs, f32 accumulation.
    h = jnp.dot(x_ref[...], w1_ref[...], preferred_element_type=jnp.float32)
    h = jnp.maximum(h + b1_ref[...], 0.0)                       # (TILE_B, H) f32
    # Output layer: contract (1, H) with (TILE_B, H) over H (rhs-transposed
    # matmul) -> lane-dense (1, TILE_B) row; avoids a (TILE_B, 1) masked-store
    # output path.
    o = lax.dot_general(
        w2_ref[...], h,
        dimension_numbers=(((1,), (1,)), ((), ())),
        preferred_element_type=jnp.float32,
    )                                                           # (1, TILE_B)
    o_ref[...] = (o + b2_ref[0, 0]).astype(o_ref.dtype)


def neural_net_forward(x, w1, b1, w2, b2):
    """x: (B, D) f32; w1: (D, H); b1: (1, H); w2: (H, 1); b2: (1, 1).
    Returns (B,) f32 (matches torch's .squeeze(1))."""
    B, D = x.shape
    H = w1.shape[1]

    tile_b = _choose_tile_b(B, D, H)
    num_tiles = pl.cdiv(B, tile_b)
    b_pad = num_tiles * tile_b

    # Stream x (and hold w1) in bf16; pad batch to a whole number of tiles.
    x_bf16 = x.astype(jnp.bfloat16)
    if b_pad != B:
        x_bf16 = jnp.pad(x_bf16, ((0, b_pad - B), (0, 0)))
    w1_bf16 = w1.astype(jnp.bfloat16)
    b1_row = jnp.asarray(b1, jnp.float32).reshape(1, H)
    w2_row = jnp.asarray(w2, jnp.float32).reshape(1, H)   # (H,1) -> (1,H) row
    b2_s = jnp.asarray(b2, jnp.float32).reshape(1, 1)

    out = pl.pallas_call(
        mlp_kernel,
        out_shape=jax.ShapeDtypeStruct((1, b_pad), jnp.float32),
        grid_spec=pltpu.PrefetchScalarGridSpec(
            num_scalar_prefetch=0,
            grid=(num_tiles,),
            in_specs=[
                pl.BlockSpec((tile_b, D), lambda i: (i, 0)),        # x: streamed
                pl.BlockSpec((D, H), lambda i: (0, 0)),             # w1: resident
                pl.BlockSpec((1, H), lambda i: (0, 0)),             # b1: resident
                pl.BlockSpec((1, H), lambda i: (0, 0)),             # w2 row: resident
                pl.BlockSpec(memory_space=pltpu.MemorySpace.SMEM),  # b2 scalar
            ],
            out_specs=pl.BlockSpec((1, tile_b), lambda i: (0, i)),  # lane-dense
        ),
        compiler_params=pltpu.CompilerParams(
            dimension_semantics=("parallel",),
        ),
    )(x_bf16, w1_bf16, b1_row, w2_row, b2_s)

    return out.reshape(b_pad)[:B]


def init_params(key, input_dim, hidden=64):
    """Deterministic synthetic parameter init (PyTorch-style uniform bounds)."""
    k1, k2, k3, k4 = jax.random.split(key, 4)
    bound1 = 1.0 / jnp.sqrt(input_dim)
    bound2 = 1.0 / jnp.sqrt(hidden)
    # Stored as (in, out) — i.e. already transposed relative to torch's (out, in).
    w1 = jax.random.uniform(k1, (input_dim, hidden), jnp.float32, -bound1, bound1)
    b1 = jax.random.uniform(k2, (1, hidden), jnp.float32, -bound1, bound1)
    w2 = jax.random.uniform(k3, (hidden, 1), jnp.float32, -bound2, bound2)
    b2 = jax.random.uniform(k4, (1, 1), jnp.float32, -bound2, bound2)
    return w1, b1, w2, b2


if __name__ == "__main__":
    key = jax.random.PRNGKey(0)
    kx, kp = jax.random.split(key)

    batch, input_dim, hidden = 8, 32, 64
    x = jax.random.normal(kx, (batch, input_dim), dtype=jnp.float32)
    w1, b1, w2, b2 = init_params(kp, input_dim, hidden)

    fwd = jax.jit(neural_net_forward)
    pred = jax.block_until_ready(fwd(x, w1, b1, w2, b2))
    assert pred.shape == (batch,)
    assert pred.dtype == jnp.float32

    # Pure-JAX reference (inputs rounded to bf16 to mirror the kernel's
    # bf16-in / f32-accumulate first layer; HIGHEST precision so the reference
    # matmuls themselves don't introduce extra bf16 passes).
    xb = x.astype(jnp.bfloat16).astype(jnp.float32)
    w1b = w1.astype(jnp.bfloat16).astype(jnp.float32)
    h_ref = jnp.maximum(
        jnp.matmul(xb, w1b, precision=lax.Precision.HIGHEST) + b1, 0.0)
    ref = (jnp.matmul(h_ref, w2, precision=lax.Precision.HIGHEST) + b2)[:, 0]
    assert jnp.allclose(pred, ref, atol=1e-2, rtol=1e-2), (
        f"max abs err {jnp.max(jnp.abs(pred - ref))}")

    # cal_loss (MSELoss, mean reduction) — trivial scalar reduction kept in
    # plain JAX.
    target = jax.random.normal(jax.random.PRNGKey(1), (batch,), dtype=jnp.float32)
    loss = jnp.mean((pred - target) ** 2)
    jax.block_until_ready(loss)

    print("KERNEL_OK")
</pallas_src>

<mosaic_0001>
module attributes {stable_mosaic.version = 11 : i64} {
  func.func @mlp_kernel(%arg0: i32, %arg1: memref<128x32xbf16, #tpu.memory_space<vmem>>, %arg2: memref<32x64xbf16, #tpu.memory_space<vmem>>, %arg3: memref<1x64xf32, #tpu.memory_space<vmem>>, %arg4: memref<1x64xf32, #tpu.memory_space<vmem>>, %arg5: memref<1x1xf32, #tpu.memory_space<smem>>, %arg6: memref<1x128xf32, #tpu.memory_space<vmem>>) attributes {dimension_semantics = [#tpu.dimension_semantics<parallel>], iteration_bounds = array<i64: 1>, scalar_prefetch = 0 : i64, scratch_operands = 0 : i64, tpu.core_type = #tpu.core_type<tc>, window_params = [{transform_indices = @transform_0, window_bounds = array<i64: 128, 32>}, {pipeline_mode = #tpu.pipeline_mode<synchronous>, transform_indices = @transform_1, window_bounds = array<i64: 32, 64>}, {pipeline_mode = #tpu.pipeline_mode<synchronous>, transform_indices = @transform_2, window_bounds = array<i64: 1, 64>}, {pipeline_mode = #tpu.pipeline_mode<synchronous>, transform_indices = @transform_3, window_bounds = array<i64: 1, 64>}, {transform_indices = @transform_4, window_bounds = array<i64: 1, 1>}, {transform_indices = @transform_5, window_bounds = array<i64: 1, 128>}]} {
    %c0 = arith.constant 0 : index
    %c0_0 = arith.constant 0 : index
    %0 = vector.load %arg1[%c0, %c0_0] : memref<128x32xbf16, #tpu.memory_space<vmem>>, vector<128x32xbf16>
    %c0_1 = arith.constant 0 : index
    %c0_2 = arith.constant 0 : index
    %1 = vector.load %arg2[%c0_1, %c0_2] : memref<32x64xbf16, #tpu.memory_space<vmem>>, vector<32x64xbf16>
    %cst = arith.constant dense<0.000000e+00> : vector<128x64xf32>
    %2 = tpu.matmul %0, %1, %cst {dimension_numbers = #tpu.dot_dimension_numbers<[1], [0], [0], [1], [0, 0, 1, 1], [], []>} : vector<128x32xbf16>, vector<32x64xbf16>, vector<128x64xf32> -> vector<128x64xf32>
    %c0_3 = arith.constant 0 : index
    %c0_4 = arith.constant 0 : index
    %3 = vector.load %arg3[%c0_3, %c0_4] : memref<1x64xf32, #tpu.memory_space<vmem>>, vector<1x64xf32>
    %4 = vector.broadcast %3 : vector<1x64xf32> to vector<128x64xf32>
    %5 = arith.addf %2, %4 : vector<128x64xf32>
    %cst_5 = arith.constant 0.000000e+00 : f32
    %6 = vector.broadcast %cst_5 : f32 to vector<128x64xf32>
    %7 = arith.maximumf %5, %6 : vector<128x64xf32>
    %c0_6 = arith.constant 0 : index
    %c0_7 = arith.constant 0 : index
    %8 = vector.load %arg4[%c0_6, %c0_7] : memref<1x64xf32, #tpu.memory_space<vmem>>, vector<1x64xf32>
    %cst_8 = arith.constant dense<0.000000e+00> : vector<1x128xf32>
    %9 = tpu.matmul %8, %7, %cst_8 {dimension_numbers = #tpu.dot_dimension_numbers<[1], [1], [0], [0], [0, 0, 1, 0], [], []>} : vector<1x64xf32>, vector<128x64xf32>, vector<1x128xf32> -> vector<1x128xf32>
    %c0_9 = arith.constant 0 : index
    %c0_10 = arith.constant 0 : index
    %10 = memref.load %arg5[%c0_9, %c0_10] : memref<1x1xf32, #tpu.memory_space<smem>>
    %11 = vector.broadcast %10 : f32 to vector<1x128xf32>
    %12 = arith.addf %9, %11 : vector<1x128xf32>
    %c0_11 = arith.constant 0 : index
    %c0_12 = arith.constant 0 : index
    %13 = vector.load %arg6[%c0_11, %c0_12] : memref<1x128xf32, #tpu.memory_space<vmem>>, vector<1x128xf32>
    tpu.vector_store %arg6[%c0_11, %c0_12], %12 {strides = array<i32>} : memref<1x128xf32, #tpu.memory_space<vmem>>, vector<1x128xf32>,
    return
  }
  func.func @transform_0(%arg0: i32) -> (i32, i32) {
    %c0_i32 = arith.constant 0 : i32
    %c0_i32_0 = arith.constant 0 : i32
    return %arg0, %c0_i32 : i32, i32
  }
  func.func @transform_1(%arg0: i32) -> (i32, i32) {
    %c0_i32 = arith.constant 0 : i32
    %c0_i32_0 = arith.constant 0 : i32
    %c0_i32_1 = arith.constant 0 : i32
    return %c0_i32, %c0_i32_0 : i32, i32
  }
  func.func @transform_2(%arg0: i32) -> (i32, i32) {
    %c0_i32 = arith.constant 0 : i32
    %c0_i32_0 = arith.constant 0 : i32
    %c0_i32_1 = arith.constant 0 : i32
    return %c0_i32, %c0_i32_0 : i32, i32
  }
  func.func @transform_3(%arg0: i32) -> (i32, i32) {
    %c0_i32 = arith.constant 0 : i32
    %c0_i32_0 = arith.constant 0 : i32
    %c0_i32_1 = arith.constant 0 : i32
    return %c0_i32, %c0_i32_0 : i32, i32
  }
  func.func @transform_4(%arg0: i32) -> (i32, i32) {
    %c0_i32 = arith.constant 0 : i32
    %c0_i32_0 = arith.constant 0 : i32
    %c0_i32_1 = arith.constant 0 : i32
    return %c0_i32, %c0_i32_0 : i32, i32
  }
  func.func @transform_5(%arg0: i32) -> (i32, i32) {
    %c0_i32 = arith.constant 0 : i32
    %c0_i32_0 = arith.constant 0 : i32
    return %c0_i32, %arg0 : i32, i32
  }
}

</mosaic_0001>

<llo_original>
// kernel: neural_net_forward.1
$region0: #{neural_net_forward.1}
  #allocation0 [shape = 'u32[]', space=smem, size = 0x4, offset = 0x4, fixed_abs, tag = 'smem constant byte address 0x4 - core index']
  #allocation1 [shape = 'u32[144,128]{1,0:T(1,128)}', space=vmem, size = 0x12000, scoped, tag = 'internal scratch']
  #allocation2 [shape = 'f32[1,1]{1,0:T(1,128)S(6)}', space=smem, size = 0x200, scoped, tag = 'scoped memory for neural_net_forward.1']
  %s0 = inlined_call_operand.vmem [shape: bf16[128,32], index: 0, kind: input, shape index: {}]
  %s1 = inlined_call_operand.vmem [shape: bf16[32,64], index: 1, kind: input, shape index: {}]
  %s2 = inlined_call_operand.vmem [shape: f32[1,64], index: 2, kind: input, shape index: {}]
  %s3 = inlined_call_operand.vmem [shape: f32[1,64], index: 3, kind: input, shape index: {}]
  %s4 = inlined_call_operand.<no memory space> [shape: f32[1,1], index: 4, kind: input, shape index: {}]
  %s5 = inlined_call_operand.vmem [shape: f32[1,128], index: 5, kind: output, shape index: {}]
  %s6 = sld [smem:[#allocation0]]
  $region30: #{neural_net_forward.1} parent=0
    _
  %s8 = ssub.s32 1, %s6
  %s9 = scalar_select 0, %s8, %s6
  %10 = sst [smem:[#allocation2]] %s4
  // Predicated region
  $region2: #{neural_net_forward.1} parent=0 // pred_check
    _
  $region3: #{neural_net_forward.1} parent=0 // pred_check_branch
    %12 = sbr.rel (0) target = $region5
  $region4: #{neural_net_forward.1} parent=0 // pred_region
    _
  $region5: #{neural_net_forward.1} parent=0 // pred_fallthru
    _
  // Predicated region
  $region6: #{neural_net_forward.1} parent=0 // pred_check
    _
  $region7: #{neural_net_forward.1} parent=0 // pred_check_branch
    %14 = sbr.rel (0) target = $region9
  $region8: #{neural_net_forward.1} parent=0 // pred_region
    _
  $region9: #{neural_net_forward.1} parent=0 // pred_fallthru
    _
  // Predicated region
  $region10: #{neural_net_forward.1} parent=0 // pred_check
    _
  $region11: #{neural_net_forward.1} parent=0 // pred_check_branch
    %16 = sbr.rel (0) target = $region13
  $region12: #{neural_net_forward.1} parent=0 // pred_region
    _
  $region13: #{neural_net_forward.1} parent=0 // pred_fallthru
    _
  // Predicated region
  $region14: #{neural_net_forward.1} parent=0 // pred_check
    _
  $region15: #{neural_net_forward.1} parent=0 // pred_check_branch
    %18 = sbr.rel (0) target = $region17
  $region16: #{neural_net_forward.1} parent=0 // pred_region
    _
  $region17: #{neural_net_forward.1} parent=0 // pred_fallthru
    _
  // Predicated region
  $region18: #{neural_net_forward.1} parent=0 // pred_check
    _
  $region19: #{neural_net_forward.1} parent=0 // pred_check_branch
    %20 = sbr.rel (0) target = $region21
  $region20: #{neural_net_forward.1} parent=0 // pred_region
    _
  $region21: #{neural_net_forward.1} parent=0 // pred_fallthru
    _
  %v22 = vld [vmem:[%s0] sm:$0xf]
  %v23 = vld [vmem:[%s0 + $0x4] sm:$0xf]
  %v24 = vld [vmem:[%s0 + $0x8] sm:$0xf]
  %v25 = vld [vmem:[%s0 + $0xc] sm:$0xf]
  %v26 = vld [vmem:[%s0 + $0x10] sm:$0xf]
  %v27 = vld [vmem:[%s0 + $0x14] sm:$0xf]
  %v28 = vld [vmem:[%s0 + $0x18] sm:$0xf]
  %v29 = vld [vmem:[%s0 + $0x1c] sm:$0xf]
  %v30 = vld [vmem:[%s0 + $0x20] sm:$0xf]
  %v31 = vld [vmem:[%s0 + $0x24] sm:$0xf]
  %v32 = vld [vmem:[%s0 + $0x28] sm:$0xf]
  %v33 = vld [vmem:[%s0 + $0x2c] sm:$0xf]
  %v34 = vld [vmem:[%s0 + $0x30] sm:$0xf]
  %v35 = vld [vmem:[%s0 + $0x34] sm:$0xf]
  %v36 = vld [vmem:[%s0 + $0x38] sm:$0xf]
  %v37 = vld [vmem:[%s0 + $0x3c] sm:$0xf]
  %v38 = vld [vmem:[%s1] sm:$0xf]
  %v39 = vld [vmem:[%s1 + $0x4] sm:$0xf]
  %v40 = vld [vmem:[%s1 + $0x8] sm:$0xf]
  %v41 = vld [vmem:[%s1 + $0xc] sm:$0xf]
  %v42 = vld [vmem:[%s2] sm:$0x1]
  %v44 = vlaneseq
  %v45 = vshrl.u32 %v44, 7
  %v46 = vsub.s32 0, %v45
  %v47 = vrot.slane %v42, %v46
  %v65 = vunpack.c.l.b16 %v22
  %v66 = vunpack.c.l.b16 %v23
  %v67 = vunpack.c.l.b16 %v24
  %v68 = vunpack.c.l.b16 %v25
  %v69 = vunpack.c.l.b16 %v26
  %v70 = vunpack.c.l.b16 %v27
  %v71 = vunpack.c.l.b16 %v28
  %v72 = vunpack.c.l.b16 %v29
  %v73 = vunpack.c.l.b16 %v30
  %v74 = vunpack.c.l.b16 %v31
  %v75 = vunpack.c.l.b16 %v32
  %v76 = vunpack.c.l.b16 %v33
  %v77 = vunpack.c.l.b16 %v34
  %v78 = vunpack.c.l.b16 %v35
  %v79 = vunpack.c.l.b16 %v36
  %v80 = vunpack.c.l.b16 %v37
  %v81 = vpack.c.b16 %v66, %v65
  %v82 = vpack.c.b16 %v68, %v67
  %v83 = vpack.c.b16 %v70, %v69
  %v84 = vpack.c.b16 %v72, %v71
  %v85 = vpack.c.b16 %v74, %v73
  %v86 = vpack.c.b16 %v76, %v75
  %v87 = vpack.c.b16 %v78, %v77
  %v88 = vpack.c.b16 %v80, %v79
  %v93 = vunpack.c.l.b16 %v38
  %v94 = vunpack.c.l.b16 %v39
  %v95 = vunpack.c.l.b16 %v40
  %v96 = vunpack.c.l.b16 %v41
  %v97 = vpack.c.b16 %v94, %v93
  %v98 = vpack.c.b16 %v96, %v95
  %vm101 = vcmask 261120
  %v103 = vsel %vm101, %v81, 0
  %v106 = vsel %vm101, %v82, 0
  %v109 = vsel %vm101, %v83, 0
  %v112 = vsel %vm101, %v84, 0
  %v115 = vsel %vm101, %v85, 0
  %v118 = vsel %vm101, %v86, 0
  %v121 = vsel %vm101, %v87, 0
  %v124 = vsel %vm101, %v88, 0
  %126 = vmatprep.subr.bf16.mxu0 0
  %127 = vmatpush1.bf16.msra.mxu0 %v97
  %128 = vmatprep.subr.bf16.mxu0 0
  %129 = vmatpush1.bf16.msra.mxu0 %v98
  %130 = vmatprep.subr.bf16.mxu0 0
  %131 = vmatpush1.bf16.msra.mxu0 0
  %132 = vmatprep.subr.bf16.mxu0 0
  %133 = vmatpush1.bf16.msra.mxu0 0
  %134 = vmatprep.subr.bf16.mxu0 0
  %135 = vmatpush1.bf16.msra.mxu0 0
  %136 = vmatprep.subr.bf16.mxu0 0
  %137 = vmatpush1.bf16.msra.mxu0 0
  %138 = vmatprep.subr.bf16.mxu0 0
  %139 = vmatpush1.bf16.msra.mxu0 0
  %140 = vmatprep.subr.bf16.mxu0 0
  %141 = vmatpush1.bf16.msra.mxu0 0
  %142 = vmatprep.subr.bf16.mxu0 0
  %143 = vmatpush1.bf16.msra.mxu0 0
  %144 = vmatprep.subr.bf16.mxu0 0
  %145 = vmatpush1.bf16.msra.mxu0 0
  %146 = vmatprep.subr.bf16.mxu0 0
  %147 = vmatpush1.bf16.msra.mxu0 0
  %148 = vmatprep.subr.bf16.mxu0 0
  %149 = vmatpush1.bf16.msra.mxu0 0
  %150 = vmatprep.subr.bf16.mxu0 0
  %151 = vmatpush1.bf16.msra.mxu0 0
  %152 = vmatprep.subr.bf16.mxu0 0
  %153 = vmatpush1.bf16.msra.mxu0 0
  %154 = vmatprep.subr.bf16.mxu0 0
  %155 = vmatpush1.bf16.msra.mxu0 0
  %156 = vmatprep.subr.bf16.mxu0 0
  %157 = vmatpush1.bf16.msra.mxu0 0
  %158 = vmatprep.mubr.bf16.mxu0 0
  %159 = vmatmul.mubr.bf16.gmra.mrb[0].mxu0 %v103
  %v160 = vpop.f32.mrb[0].mxu0
  %v161 = vadd.f32 %v47, %v160
  %v162 = vpop.f32.mrb[0].mxu0
  %v163 = vpop.f32.mrb[0].mxu0
  %v164 = vadd.f32 %v47, %v163
  %v165 = vpop.f32.mrb[0].mxu0
  %166 = vmatprep.mubr.bf16.mxu0 0
  %167 = vmatmul.mubr.bf16.gmra.mrb[0].mxu0 %v106
  %v168 = vpop.f32.mrb[0].mxu0
  %v169 = vadd.f32 %v47, %v168
  %v170 = vpop.f32.mrb[0].mxu0
  %v171 = vpop.f32.mrb[0].mxu0
  %v172 = vadd.f32 %v47, %v171
  %v173 = vpop.f32.mrb[0].mxu0
  %174 = vmatprep.mubr.bf16.mxu0 0
  %175 = vmatmul.mubr.bf16.gmra.mrb[0].mxu0 %v109
  %v176 = vpop.f32.mrb[0].mxu0
  %v177 = vadd.f32 %v47, %v176
  %v178 = vpop.f32.mrb[0].mxu0
  %v179 = vpop.f32.mrb[0].mxu0
  %v180 = vadd.f32 %v47, %v179
  %v181 = vpop.f32.mrb[0].mxu0
  %182 = vmatprep.mubr.bf16.mxu0 0
  %183 = vmatmul.mubr.bf16.gmra.mrb[0].mxu0 %v112
  %v184 = vpop.f32.mrb[0].mxu0
  %v185 = vadd.f32 %v47, %v184
  %v186 = vpop.f32.mrb[0].mxu0
  %v187 = vpop.f32.mrb[0].mxu0
  %v188 = vadd.f32 %v47, %v187
  %v189 = vpop.f32.mrb[0].mxu0
  %190 = vmatprep.mubr.bf16.mxu0 0
  %191 = vmatmul.mubr.bf16.gmra.mrb[0].mxu0 %v115
  %v192 = vpop.f32.mrb[0].mxu0
  %v193 = vadd.f32 %v47, %v192
  %v194 = vpop.f32.mrb[0].mxu0
  %v195 = vpop.f32.mrb[0].mxu0
  %v196 = vadd.f32 %v47, %v195
  %v197 = vpop.f32.mrb[0].mxu0
  %198 = vmatprep.mubr.bf16.mxu0 0
  %199 = vmatmul.mubr.bf16.gmra.mrb[0].mxu0 %v118
  %v200 = vpop.f32.mrb[0].mxu0
  %v201 = vadd.f32 %v47, %v200
  %v202 = vpop.f32.mrb[0].mxu0
  %v203 = vpop.f32.mrb[0].mxu0
  %v204 = vadd.f32 %v47, %v203
  %v205 = vpop.f32.mrb[0].mxu0
  %206 = vmatprep.mubr.bf16.mxu0 0
  %207 = vmatmul.mubr.bf16.gmra.mrb[0].mxu0 %v121
  %v208 = vpop.f32.mrb[0].mxu0
  %v209 = vadd.f32 %v47, %v208
  %v210 = vpop.f32.mrb[0].mxu0
  %v211 = vpop.f32.mrb[0].mxu0
  %v212 = vadd.f32 %v47, %v211
  %v213 = vpop.f32.mrb[0].mxu0
  %214 = vmatprep.mubr.bf16.mxu0 0
  %215 = vmatmul.mubr.bf16.gmra.mrb[0].mxu0 %v124
  %v216 = vpop.f32.mrb[0].mxu0
  %v217 = vadd.f32 %v47, %v216
  %v218 = vpop.f32.mrb[0].mxu0
  %v219 = vpop.f32.mrb[0].mxu0
  %v220 = vadd.f32 %v47, %v219
  %v221 = vpop.f32.mrb[0].mxu0
  %222 = vdwg.mxu0
  %v223 = vmax.f32 %v161, 0.0
  %v224 = vmax.f32 %v164, 0.0
  %v225 = vmax.f32 %v169, 0.0
  %v226 = vmax.f32 %v172, 0.0
  %v227 = vmax.f32 %v177, 0.0
  %v228 = vmax.f32 %v180, 0.0
  %v229 = vmax.f32 %v185, 0.0
  %v230 = vmax.f32 %v188, 0.0
  %v231 = vmax.f32 %v193, 0.0
  %v232 = vmax.f32 %v196, 0.0
  %v233 = vmax.f32 %v201, 0.0
  %v234 = vmax.f32 %v204, 0.0
  %v235 = vmax.f32 %v209, 0.0
  %v236 = vmax.f32 %v212, 0.0
  %v237 = vmax.f32 %v217, 0.0
  %v238 = vmax.f32 %v220, 0.0
  %v239 = vld [vmem:[%s3] sm:$0x1]
  %s240 = sld [smem:[#allocation2]]
  %v241 = vstv %s240
  %vm242 = vcmask 523264
  %v244 = vsel %vm242, %v239, 0
  %v247 = vsel %vm242, %v223, 0
  %v250 = vsel %vm242, %v224, 0
  %v253 = vsel %vm242, %v225, 0
  %v256 = vsel %vm242, %v226, 0
  %v259 = vsel %vm242, %v227, 0
  %v262 = vsel %vm242, %v228, 0
  %v265 = vsel %vm242, %v229, 0
  %v268 = vsel %vm242, %v230, 0
  %v271 = vsel %vm242, %v231, 0
  %v274 = vsel %vm242, %v232, 0
  %v277 = vsel %vm242, %v233, 0
  %v280 = vsel %vm242, %v234, 0
  %v283 = vsel %vm242, %v235, 0
  %v286 = vsel %vm242, %v236, 0
  %v289 = vsel %vm242, %v237, 0
  %v292 = vsel %vm242, %v238, 0
  %294 = vmatprep.subr.mxu0 0.0
  %295 = vmatpush1.xpose.msra.mxu0 %v247
  %296 = vmatprep.subr.mxu0 0.0
  %297 = vmatpush1.xpose.msra.mxu0 %v250
  %298 = vmatprep.subr.mxu0 0.0
  %299 = vmatpush1.xpose.msra.mxu0 %v253
  %300 = vmatprep.subr.mxu0 0.0
  %301 = vmatpush1.xpose.msra.mxu0 %v256
  %302 = vmatprep.subr.mxu0 0.0
  %303 = vmatpush1.xpose.msra.mxu0 %v259
  %304 = vmatprep.subr.mxu0 0.0
  %305 = vmatpush1.xpose.msra.mxu0 %v262
  %306 = vmatprep.subr.mxu0 0.0
  %307 = vmatpush1.xpose.msra.mxu0 %v265
  %308 = vmatprep.subr.mxu0 0.0
  %309 = vmatpush1.xpose.msra.mxu0 %v268
  %310 = vmatprep.subr.mxu0 0.0
  %311 = vmatpush1.xpose.msra.mxu0 %v271
  %312 = vmatprep.subr.mxu0 0.0
  %313 = vmatpush1.xpose.msra.mxu0 %v274
  %314 = vmatprep.subr.mxu0 0.0
  %315 = vmatpush1.xpose.msra.mxu0 %v277
  %316 = vmatprep.subr.mxu0 0.0
  %317 = vmatpush1.xpose.msra.mxu0 %v280
  %318 = vmatprep.subr.mxu0 0.0
  %319 = vmatpush1.xpose.msra.mxu0 %v283
  %320 = vmatprep.subr.mxu0 0.0
  %321 = vmatpush1.xpose.msra.mxu0 %v286
  %322 = vmatprep.subr.mxu0 0.0
  %323 = vmatpush1.xpose.msra.mxu0 %v289
  %324 = vmatprep.subr.mxu0 0.0
  %325 = vmatpush1.xpose.msra.mxu0 %v292
  %326 = vmatprep.subr.mxu0 0.0
  %327 = vmatpush1.xpose.msra.mxu0 0.0
  %328 = vmatprep.subr.mxu0 0.0
  %329 = vmatpush1.xpose.msra.mxu0 0.0
  %330 = vmatprep.subr.mxu0 0.0
  %331 = vmatpush1.xpose.msra.mxu0 0.0
  %332 = vmatprep.subr.mxu0 0.0
  %333 = vmatpush1.xpose.msra.mxu0 0.0
  %334 = vmatprep.subr.mxu0 0.0
  %335 = vmatpush1.xpose.msra.mxu0 0.0
  %336 = vmatprep.subr.mxu0 0.0
  %337 = vmatpush1.xpose.msra.mxu0 0.0
  %338 = vmatprep.subr.mxu0 0.0
  %339 = vmatpush1.xpose.msra.mxu0 0.0
  %340 = vmatprep.subr.mxu0 0.0
  %341 = vmatpush1.xpose.msra.mxu0 0.0
  %342 = vmatprep.subr.mxu0 0.0
  %343 = vmatpush1.xpose.msra.mxu0 0.0
  %344 = vmatprep.subr.mxu0 0.0
  %345 = vmatpush1.xpose.msra.mxu0 0.0
  %346 = vmatprep.subr.mxu0 0.0
  %347 = vmatpush1.xpose.msra.mxu0 0.0
  %348 = vmatprep.subr.mxu0 0.0
  %349 = vmatpush1.xpose.msra.mxu0 0.0
  %350 = vmatprep.subr.mxu0 0.0
  %351 = vmatpush1.xpose.msra.mxu0 0.0
  %352 = vmatprep.subr.mxu0 0.0
  %353 = vmatpush1.xpose.msra.mxu0 0.0
  %354 = vmatprep.subr.mxu0 0.0
  %355 = vmatpush1.xpose.msra.mxu0 0.0
  %356 = vmatprep.subr.mxu0 0.0
  %357 = vmatpush1.xpose.msra.mxu0 0.0
  %358 = vmatprep.mubr.f32.mxu0 0.0
  %359 = vmatmul.mubr.f32.gmra.mrb[0].mxu0 %v244
  %v360 = vpop.f32.mrb[0].mxu0
  %v361 = vadd.f32 %v241, %v360
  %v362 = vpop.f32.mrb[0].mxu0
  %363 = vdwg.mxu0
  %364 = vst [vmem:[%s5] sm:$0x1] %v361
  // Predicated region
  $region22: #{neural_net_forward.1} parent=0 // pred_check
    _
  $region23: #{neural_net_forward.1} parent=0 // pred_check_branch
    %366 = sbr.rel (0) target = $region25
  $region24: #{neural_net_forward.1} parent=0 // pred_region
    _
  $region25: #{neural_net_forward.1} parent=0 // pred_fallthru
    _
  // Predicated region
  $region26: #{neural_net_forward.1} parent=0 // pred_check
    _
  $region27: #{neural_net_forward.1} parent=0 // pred_check_branch
    %368 = sbr.rel (0) target = $region29
  $region28: #{neural_net_forward.1} parent=0 // pred_region
    _
  $region29: #{neural_net_forward.1} parent=0 // pred_fallthru
    _

</llo_original>
